<compile_context>
chip_gen: v7x
topology: tpu7x:2x2x1
jax: 0.10.0
libtpu: 0.0.40
codegen_flags: <defaults>
</compile_context>

<pallas_src>
import functools
import math

import jax
import jax.numpy as jnp
from jax.experimental import pallas as pl
from jax.experimental.pallas import tpu as pltpu


def fused_affine_kernel(x_ref, w_ref, b_ref, o_ref):
    # Dropout between the original layers is eval-mode identity (no-op).
    x = x_ref[...].astype(w_ref.dtype)              # in-kernel cast (f32->bf16)
    y = jnp.dot(x, w_ref[...], preferred_element_type=jnp.float32) + b_ref[...]
    o_ref[...] = y.astype(o_ref.dtype)


def prepare_params(params, matmul_dtype=jnp.float32):
    """Collapse the 4 nn.Linear layers into one affine map, once.

    params: list of (W, b) in PyTorch nn.Linear layout (out_features, in_features).
    Returns (w_fused, b_fused, w_folded, b_folded):
      w_fused : (d_in, d_out)        matmul_dtype
      b_fused : (1, d_out)           float32
      w_folded: (fold*d_in, 128)     block-diagonal, matmul_dtype (or None)
      b_folded: (1, 128)             float32 (or None)
    The folded pair lets the kernel read/write full-128-lane tiles whenever the
    batch is a multiple of fold = 128 // d_out.
    """
    wts = [jnp.asarray(w, jnp.float32).T for w, _ in params]       # (in, out)
    bs = [jnp.asarray(b, jnp.float32).reshape(1, -1) for _, b in params]

    w_fused = functools.reduce(jnp.matmul, wts)                     # (d_in, d_out)
    b_fused = bs[0]
    for wt, b in zip(wts[1:], bs[1:]):
        b_fused = b_fused @ wt + b                                  # (1, d_out)

    d_in, d_out = w_fused.shape
    w_folded = b_folded = None
    if d_out < 128 and 128 % d_out == 0:
        fold = 128 // d_out
        # Block-diagonal weight: out[r, j*d_out + c] = sum_k x[r, j*d_in + k] W[k, c]
        eye = jnp.eye(fold, dtype=jnp.float32)
        w_folded = jnp.einsum("ij,kc->ikjc", eye, w_fused).reshape(
            fold * d_in, fold * d_out)
        b_folded = jnp.tile(b_fused, (1, fold))
        w_folded = w_folded.astype(matmul_dtype)

    return w_fused.astype(matmul_dtype), b_fused, w_folded, b_folded


def _round_up(x, m):
    return ((x + m - 1) // m) * m


@functools.partial(jax.jit, static_argnames=("block_batch", "out_dtype"))
def net_forward(x, prepped, *, block_batch=4096, out_dtype=jnp.float32):
    """Fused forward pass of Net (eval mode). `prepped` from prepare_params()."""
    w_fused, b_fused, w_folded, b_folded = prepped
    B, d_in = x.shape
    d_out = w_fused.shape[1]

    # Lane-dense path: fold `fold` batch rows into the lane dimension so the
    # output tile is (rows, 128) and the input tile is (rows, fold*d_in).
    fold = 1
    w, b = w_fused, b_fused
    if w_folded is not None:
        f = w_folded.shape[1] // d_out
        if B % f == 0:
            fold = f
            w, b = w_folded, b_folded

    rows = B // fold
    cols_in = d_in * fold
    cols_out = d_out * fold
    x2 = x.reshape(rows, cols_in)          # free, row-major metadata reshape

    # Tile choice: large tiles (amortize ~0.35us/step), 8-sublane multiples,
    # and >= 2 grid steps when the batch is big enough (v7x megacore).
    max_rows = max(8, (block_batch // fold) // 8 * 8)
    tm = min(rows, max_rows)
    if tm == rows and rows >= 16:
        tm = min(rows, _round_up(pl.cdiv(rows, 2), 8))
    elif tm < rows:
        tm = max(8, tm // 8 * 8)
    grid = (pl.cdiv(rows, tm),)

    flops = 2 * B * d_in * d_out
    bytes_accessed = (x.size * x.dtype.itemsize
                      + w.size * w.dtype.itemsize
                      + b.size * b.dtype.itemsize
                      + B * d_out * jnp.dtype(out_dtype).itemsize)

    out2 = pl.pallas_call(
        fused_affine_kernel,
        out_shape=jax.ShapeDtypeStruct((rows, cols_out), out_dtype),
        grid_spec=pltpu.PrefetchScalarGridSpec(
            num_scalar_prefetch=0,
            grid=grid,
            in_specs=[
                pl.BlockSpec((tm, cols_in), lambda i: (i, 0)),   # x: batch-tiled
                pl.BlockSpec(w.shape, lambda i: (0, 0)),         # weights: resident
                pl.BlockSpec(b.shape, lambda i: (0, 0)),         # bias: resident
            ],
            out_specs=pl.BlockSpec((tm, cols_out), lambda i: (i, 0)),
        ),
        compiler_params=pltpu.CompilerParams(
            dimension_semantics=("parallel",)),                  # megacore shard
        cost_estimate=pl.CostEstimate(
            flops=flops, transcendentals=0, bytes_accessed=bytes_accessed),
    )(x2, w, b)

    return out2.reshape(B, d_out)          # free metadata reshape back


def init_linear(key, in_features, out_features, dtype=jnp.float32):
    """Deterministic init mimicking nn.Linear (uniform +/- 1/sqrt(in))."""
    kw, kb = jax.random.split(key)
    bound = 1.0 / math.sqrt(in_features)
    w = jax.random.uniform(kw, (out_features, in_features), dtype, -bound, bound)
    b = jax.random.uniform(kb, (out_features,), dtype, -bound, bound)
    return w, b


def reference_forward(x, params):
    h = x
    for w, b in params:
        h = h @ w.T + b            # dropout = identity in eval mode
    return h


if __name__ == "__main__":
    # param_list = [in, h1, h2, h3, out]
    param_list = [32, 64, 48, 32, 16]
    batch = 8

    key = jax.random.PRNGKey(0)
    k_x, k_big, k_odd, k1, k2, k3, k4 = jax.random.split(key, 7)

    params = [
        init_linear(k1, param_list[0], param_list[1]),
        init_linear(k2, param_list[1], param_list[2]),
        init_linear(k3, param_list[2], param_list[3]),
        init_linear(k4, param_list[3], param_list[4]),
    ]
    x = jax.random.normal(k_x, (batch, param_list[0]), dtype=jnp.float32)

    # ---- f32, lane-dense folded path, single-tile grid (B=8) ----
    prepped_f32 = prepare_params(params, matmul_dtype=jnp.float32)
    out = jax.block_until_ready(net_forward(x, prepped_f32))
    ref = reference_forward(x, params)
    assert out.shape == (batch, param_list[4])
    assert jnp.allclose(out, ref, atol=1e-3, rtol=1e-3)

    # ---- f32, folded path, multi-step parallel grid (B=512 -> 2 grid steps) ----
    big = 512
    x_big = jax.random.normal(k_big, (big, param_list[0]), dtype=jnp.float32)
    out_big = jax.block_until_ready(net_forward(x_big, prepped_f32))
    ref_big = reference_forward(x_big, params)
    assert out_big.shape == (big, param_list[4])
    assert jnp.allclose(out_big, ref_big, atol=1e-3, rtol=1e-3)

    # ---- unfolded fallback path (batch not a multiple of 128 // d_out) ----
    x_odd = jax.random.normal(k_odd, (5, param_list[0]), dtype=jnp.float32)
    out_odd = jax.block_until_ready(net_forward(x_odd, prepped_f32))
    ref_odd = reference_forward(x_odd, params)
    assert out_odd.shape == (5, param_list[4])
    assert jnp.allclose(out_odd, ref_odd, atol=1e-3, rtol=1e-3)

    # ---- bf16 weights (x DMA'd as f32, cast in-kernel; f32 accumulation) ----
    prepped_bf16 = prepare_params(params, matmul_dtype=jnp.bfloat16)
    out_bf16 = jax.block_until_ready(net_forward(x, prepped_bf16))
    assert out_bf16.shape == (batch, param_list[4])
    assert bool(jnp.all(jnp.isfinite(out_bf16)))
    assert jnp.allclose(out_bf16, ref, atol=1e-1, rtol=1e-1)

    print("KERNEL_OK")
</pallas_src>

<mosaic_0001>
module attributes {stable_mosaic.version = 11 : i64} {
  func.func @fused_affine_kernel(%arg0: i32, %arg1: memref<1x256xf32, #tpu.memory_space<vmem>>, %arg2: memref<256x128xf32, #tpu.memory_space<vmem>>, %arg3: memref<1x128xf32, #tpu.memory_space<vmem>>, %arg4: memref<1x128xf32, #tpu.memory_space<vmem>>) attributes {dimension_semantics = [#tpu.dimension_semantics<parallel>], iteration_bounds = array<i64: 1>, scalar_prefetch = 0 : i64, scratch_operands = 0 : i64, tpu.core_type = #tpu.core_type<tc>, window_params = [{transform_indices = @transform_0, window_bounds = array<i64: 1, 256>}, {pipeline_mode = #tpu.pipeline_mode<synchronous>, transform_indices = @transform_1, window_bounds = array<i64: 256, 128>}, {pipeline_mode = #tpu.pipeline_mode<synchronous>, transform_indices = @transform_2, window_bounds = array<i64: 1, 128>}, {transform_indices = @transform_3, window_bounds = array<i64: 1, 128>}]} {
    %c0 = arith.constant 0 : index
    %c0_0 = arith.constant 0 : index
    %0 = vector.load %arg1[%c0, %c0_0] : memref<1x256xf32, #tpu.memory_space<vmem>>, vector<1x256xf32>
    %c0_1 = arith.constant 0 : index
    %c0_2 = arith.constant 0 : index
    %1 = vector.load %arg2[%c0_1, %c0_2] : memref<256x128xf32, #tpu.memory_space<vmem>>, vector<256x128xf32>
    %cst = arith.constant dense<0.000000e+00> : vector<1x128xf32>
    %2 = tpu.matmul %0, %1, %cst {dimension_numbers = #tpu.dot_dimension_numbers<[1], [0], [0], [1], [0, 0, 1, 1], [], []>} : vector<1x256xf32>, vector<256x128xf32>, vector<1x128xf32> -> vector<1x128xf32>
    %c0_3 = arith.constant 0 : index
    %c0_4 = arith.constant 0 : index
    %3 = vector.load %arg3[%c0_3, %c0_4] : memref<1x128xf32, #tpu.memory_space<vmem>>, vector<1x128xf32>
    %4 = arith.addf %2, %3 : vector<1x128xf32>
    %c0_5 = arith.constant 0 : index
    %c0_6 = arith.constant 0 : index
    %5 = vector.load %arg4[%c0_5, %c0_6] : memref<1x128xf32, #tpu.memory_space<vmem>>, vector<1x128xf32>
    tpu.vector_store %arg4[%c0_5, %c0_6], %4 {strides = array<i32>} : memref<1x128xf32, #tpu.memory_space<vmem>>, vector<1x128xf32>,
    return
  }
  func.func @transform_0(%arg0: i32) -> (i32, i32) {
    %c0_i32 = arith.constant 0 : i32
    %c0_i32_0 = arith.constant 0 : i32
    return %arg0, %c0_i32 : i32, i32
  }
  func.func @transform_1(%arg0: i32) -> (i32, i32) {
    %c0_i32 = arith.constant 0 : i32
    %c0_i32_0 = arith.constant 0 : i32
    %c0_i32_1 = arith.constant 0 : i32
    return %c0_i32, %c0_i32_0 : i32, i32
  }
  func.func @transform_2(%arg0: i32) -> (i32, i32) {
    %c0_i32 = arith.constant 0 : i32
    %c0_i32_0 = arith.constant 0 : i32
    %c0_i32_1 = arith.constant 0 : i32
    return %c0_i32, %c0_i32_0 : i32, i32
  }
  func.func @transform_3(%arg0: i32) -> (i32, i32) {
    %c0_i32 = arith.constant 0 : i32
    %c0_i32_0 = arith.constant 0 : i32
    return %arg0, %c0_i32 : i32, i32
  }
}

</mosaic_0001>

<llo_original>
// kernel: net_forward.1
$region0: #{net_forward.1}
  #allocation0 [shape = 'u32[]', space=smem, size = 0x4, offset = 0x4, fixed_abs, tag = 'smem constant byte address 0x4 - core index']
  #allocation1 [shape = 'u32[144,128]{1,0:T(1,128)}', space=vmem, size = 0x12000, scoped, tag = 'internal scratch']
  %s0 = inlined_call_operand.vmem [shape: f32[1,256], index: 0, kind: input, shape index: {}]
  %s1 = inlined_call_operand.hbm [shape: f32[256,128], index: 1, kind: input, shape index: {}]
  %s2 = inlined_call_operand.vmem [shape: f32[1,128], index: 2, kind: input, shape index: {}]
  %s3 = inlined_call_operand.vmem [shape: f32[1,128], index: 3, kind: output, shape index: {}]
  %s4 = sld [smem:[#allocation0]]
  $region26: #{net_forward.1} parent=0
    _
  %s6 = ssub.s32 1, %s4
  %s7 = scalar_select 0, %s6, %s4
  $region1: #{net_forward.1} parent=0
    #allocation2 [shape = 'u8[131072]{0}', space=vmem, size = 0x20000, scoped, tag = 'input window, operand 1, single buffered']
    #allocation3 [shape = 's32[1]{0}', space=sflag, size = 0x4, scoped, tag = 'scoped memory for net_forward.1']
    %8 = vsyncpa [#allocation3], 0
    // Predicated region
    $region2: #{net_forward.1} parent=1 // pred_check
      _
    $region3: #{net_forward.1} parent=1 // pred_check_branch
      %10 = sbr.rel (0) target = $region5
    $region4: #{net_forward.1} parent=1 // pred_region
      _
    $region5: #{net_forward.1} parent=1 // pred_fallthru
      _
    // Predicated region
    $region6: #{net_forward.1} parent=1 // pred_check
      _
    $region7: #{net_forward.1} parent=1 // pred_check_branch
      %12 = sbr.rel (0) target = $region9
    $region8: #{net_forward.1} parent=1 // pred_region
      %s14 = ssub.s32 4096, 4096
      %15 = vsyncadd [#allocation3], %s14
      %s16 = sshll.u32 [#allocation2], 4
      %s17 = int_to_ptr.vmem [resolvable:$true] %s16
      %22 = dma.hbm_to_vmem [thread:$0]  %s1, 4096, %s17, [#allocation3], 128, 128, 8
    $region9: #{net_forward.1} parent=1 // pred_fallthru
      _
    // Predicated region
    $region10: #{net_forward.1} parent=1 // pred_check
      _
    $region11: #{net_forward.1} parent=1 // pred_check_branch
      %24 = sbr.rel (0) target = $region13
    $region12: #{net_forward.1} parent=1 // pred_region
      _
    $region13: #{net_forward.1} parent=1 // pred_fallthru
      _
    // Predicated region
    $region14: #{net_forward.1} parent=1 // pred_check
      _
    $region15: #{net_forward.1} parent=1 // pred_check_branch
      %26 = sbr.rel (0) target = $region17
    $region16: #{net_forward.1} parent=1 // pred_region
      %27 = dma.done [#allocation3], 4096
    $region17: #{net_forward.1} parent=1 // pred_fallthru
      _
    %v28 = vld [vmem:[%s0] sm:$0x3]
    %v29 = vld [vmem:[#allocation2] sm:$0xff]
    %v30 = vld [vmem:[#allocation2 + $0x8] sm:$0xff]
    %v31 = vld [vmem:[#allocation2 + $0x10] sm:$0xff]
    %v32 = vld [vmem:[#allocation2 + $0x18] sm:$0xff]
    %v33 = vld [vmem:[#allocation2 + $0x20] sm:$0xff]
    %v34 = vld [vmem:[#allocation2 + $0x28] sm:$0xff]
    %v35 = vld [vmem:[#allocation2 + $0x30] sm:$0xff]
    %v36 = vld [vmem:[#allocation2 + $0x38] sm:$0xff]
    %v37 = vld [vmem:[#allocation2 + $0x40] sm:$0xff]
    %v38 = vld [vmem:[#allocation2 + $0x48] sm:$0xff]
    %v39 = vld [vmem:[#allocation2 + $0x50] sm:$0xff]
    %v40 = vld [vmem:[#allocation2 + $0x58] sm:$0xff]
    %v41 = vld [vmem:[#allocation2 + $0x60] sm:$0xff]
    %v42 = vld [vmem:[#allocation2 + $0x68] sm:$0xff]
    %v43 = vld [vmem:[#allocation2 + $0x70] sm:$0xff]
    %v44 = vld [vmem:[#allocation2 + $0x78] sm:$0xff]
    %v45 = vld [vmem:[#allocation2 + $0x80] sm:$0xff]
    %v46 = vld [vmem:[#allocation2 + $0x88] sm:$0xff]
    %v47 = vld [vmem:[#allocation2 + $0x90] sm:$0xff]
    %v48 = vld [vmem:[#allocation2 + $0x98] sm:$0xff]
    %v49 = vld [vmem:[#allocation2 + $0xa0] sm:$0xff]
    %v50 = vld [vmem:[#allocation2 + $0xa8] sm:$0xff]
    %v51 = vld [vmem:[#allocation2 + $0xb0] sm:$0xff]
    %v52 = vld [vmem:[#allocation2 + $0xb8] sm:$0xff]
    %v53 = vld [vmem:[#allocation2 + $0xc0] sm:$0xff]
    %v54 = vld [vmem:[#allocation2 + $0xc8] sm:$0xff]
    %v55 = vld [vmem:[#allocation2 + $0xd0] sm:$0xff]
    %v56 = vld [vmem:[#allocation2 + $0xd8] sm:$0xff]
    %v57 = vld [vmem:[#allocation2 + $0xe0] sm:$0xff]
    %v58 = vld [vmem:[#allocation2 + $0xe8] sm:$0xff]
    %v59 = vld [vmem:[#allocation2 + $0xf0] sm:$0xff]
    %v60 = vld [vmem:[#allocation2 + $0xf8] sm:$0xff]
    %v61 = vld [vmem:[%s2] sm:$0x1]
    %v63 = vlaneseq
    %v64 = vshrl.u32 %v63, 7
    %v65 = vsub.s32 0, %v64
    %v66 = vrot.slane %v28, %v65
    %v67 = vlaneseq
    %v68 = vshrl.u32 %v67, 7
    %v69 = vsub.s32 1, %v68
    %v70 = vrot.slane %v28, %v69
    %73 = vmatprep.subr.mxu0 0.0
    %74 = vmatpush1.msra.mxu0 %v29
    %75 = vmatprep.subr.mxu0 0.0
    %76 = vmatpush1.msra.mxu0 %v30
    %77 = vmatprep.subr.mxu0 0.0
    %78 = vmatpush1.msra.mxu0 %v31
    %79 = vmatprep.subr.mxu0 0.0
    %80 = vmatpush1.msra.mxu0 %v32
    %81 = vmatprep.subr.mxu0 0.0
    %82 = vmatpush1.msra.mxu0 %v33
    %83 = vmatprep.subr.mxu0 0.0
    %84 = vmatpush1.msra.mxu0 %v34
    %85 = vmatprep.subr.mxu0 0.0
    %86 = vmatpush1.msra.mxu0 %v35
    %87 = vmatprep.subr.mxu0 0.0
    %88 = vmatpush1.msra.mxu0 %v36
    %89 = vmatprep.subr.mxu0 0.0
    %90 = vmatpush1.msra.mxu0 %v37
    %91 = vmatprep.subr.mxu0 0.0
    %92 = vmatpush1.msra.mxu0 %v38
    %93 = vmatprep.subr.mxu0 0.0
    %94 = vmatpush1.msra.mxu0 %v39
    %95 = vmatprep.subr.mxu0 0.0
    %96 = vmatpush1.msra.mxu0 %v40
    %97 = vmatprep.subr.mxu0 0.0
    %98 = vmatpush1.msra.mxu0 %v41
    %99 = vmatprep.subr.mxu0 0.0
    %100 = vmatpush1.msra.mxu0 %v42
    %101 = vmatprep.subr.mxu0 0.0
    %102 = vmatpush1.msra.mxu0 %v43
    %103 = vmatprep.subr.mxu0 0.0
    %104 = vmatpush1.msra.mxu0 %v44
    %105 = vmatprep.subr.mxu0 0.0
    %106 = vmatpush1.msra.mxu0 %v45
    %107 = vmatprep.subr.mxu0 0.0
    %108 = vmatpush1.msra.mxu0 %v46
    %109 = vmatprep.subr.mxu0 0.0
    %110 = vmatpush1.msra.mxu0 %v47
    %111 = vmatprep.subr.mxu0 0.0
    %112 = vmatpush1.msra.mxu0 %v48
    %113 = vmatprep.subr.mxu0 0.0
    %114 = vmatpush1.msra.mxu0 %v49
    %115 = vmatprep.subr.mxu0 0.0
    %116 = vmatpush1.msra.mxu0 %v50
    %117 = vmatprep.subr.mxu0 0.0
    %118 = vmatpush1.msra.mxu0 %v51
    %119 = vmatprep.subr.mxu0 0.0
    %120 = vmatpush1.msra.mxu0 %v52
    %121 = vmatprep.subr.mxu0 0.0
    %122 = vmatpush1.msra.mxu0 %v53
    %123 = vmatprep.subr.mxu0 0.0
    %124 = vmatpush1.msra.mxu0 %v54
    %125 = vmatprep.subr.mxu0 0.0
    %126 = vmatpush1.msra.mxu0 %v55
    %127 = vmatprep.subr.mxu0 0.0
    %128 = vmatpush1.msra.mxu0 %v56
    %129 = vmatprep.subr.mxu0 0.0
    %130 = vmatpush1.msra.mxu0 %v57
    %131 = vmatprep.subr.mxu0 0.0
    %132 = vmatpush1.msra.mxu0 %v58
    %133 = vmatprep.subr.mxu0 0.0
    %134 = vmatpush1.msra.mxu0 %v59
    %135 = vmatprep.subr.mxu0 0.0
    %136 = vmatpush1.msra.mxu0 %v60
    %137 = vmatprep.mubr.f32.mxu0 %v70
    %138 = vmatmul.mubr.f32.gmra.mrb[0].mxu0 %v66
    %v139 = vpop.f32.mrb[0].mxu0
    %v140 = vadd.f32 %v61, %v139
    %v141 = vpop.f32.mrb[0].mxu0
    %142 = vdwg.mxu0
    %143 = vst [vmem:[%s3] sm:$0x1] %v140
    // Predicated region
    $region18: #{net_forward.1} parent=1 // pred_check
      _
    $region19: #{net_forward.1} parent=1 // pred_check_branch
      %145 = sbr.rel (0) target = $region21
    $region20: #{net_forward.1} parent=1 // pred_region
      _
    $region21: #{net_forward.1} parent=1 // pred_fallthru
      _
    // Predicated region
    $region22: #{net_forward.1} parent=1 // pred_check
      _
    $region23: #{net_forward.1} parent=1 // pred_check_branch
      %147 = sbr.rel (0) target = $region25
    $region24: #{net_forward.1} parent=1 // pred_region
      _
    $region25: #{net_forward.1} parent=1 // pred_fallthru
      _
    %148 = vsyncpa [#allocation3], 1

</llo_original>
